<compile_context>
chip_gen: v7x
topology: tpu7x:2x2x1
jax: 0.10.0
libtpu: 0.0.40
codegen_flags: <defaults>
</compile_context>

<pallas_src>
import functools
from typing import NamedTuple

import jax
import jax.numpy as jnp
from jax.experimental import pallas as pl
from jax.experimental.pallas import tpu as pltpu


def _round_up(a, m):
    return -(-a // m) * m


def _cdiv(a, b):
    return -(-a // b)


def _vmem_capacity_bytes():
    """Physical per-core VMEM; conservative (v7x, 64 MiB) fallback if the query fails."""
    try:
        cap = getattr(pltpu.get_tpu_info(), "vmem_capacity_bytes", None)
        if cap:
            return int(cap)
    except Exception:
        pass
    return 64 * 1024 * 1024


class _Plan(NamedTuple):
    tm: int
    tk: int
    tn: int
    Np: int
    Kp: int
    Fp: int
    x_resident: bool
    vmem_limit: int


# (tm, tk) targets, largest first; the planner walks down until the
# double-buffered working set fits the per-generation VMEM budget.
_TILE_TARGETS = (
    (1024, 2048), (1024, 1024), (512, 1024), (512, 512),
    (256, 512), (256, 256), (128, 256), (128, 128),
)


def _plan_tiles(N, F, adj_itemsize, x_itemsize):
    cap = _vmem_capacity_bytes()
    budget = max(24 * 1024 * 1024, int(0.6 * cap))

    N128 = _round_up(N, 128)
    tn = min(_round_up(F, 128), 2048)  # collapse F into one block whenever it fits

    choice = None
    tm = tk = 128
    Np = Kp = N128
    streamed = 0
    while True:
        for tm_t, tk_t in _TILE_TARGETS:
            # Split the 128-rounded N into near-equal 128-aligned chunks so the
            # padded adjacency stays within ~one block of N on each axis.
            gk = max(1, _cdiv(N128, tk_t))
            tk = _round_up(_cdiv(N128, gk), 128)
            Kp = tk * gk
            gm = max(1, _cdiv(N128, tm_t))
            if N128 >= 256:
                gm = max(gm, 2)  # keep the parallel i-axis shardable (v7x megacore)
            tm = _round_up(_cdiv(N128, gm), 128)
            Np = tm * gm
            streamed = (2 * tm * tk * adj_itemsize
                        + 2 * tk * tn * x_itemsize
                        + 2 * tm * tn * 4)
            if streamed <= budget:
                choice = (tm, tk, Np, Kp, streamed)
                break
        if choice is not None or tn == 128:
            break
        tn = max(128, _round_up(tn // 2, 128))

    if choice is None:  # nothing fit the budget; take the smallest config anyway
        choice = (tm, tk, Np, Kp, streamed)
    tm, tk, Np, Kp, streamed = choice
    Fp = _round_up(F, tn)

    # Hold x fully VMEM-resident when the feature axis is collapsed and the
    # (Kp, tn) slab fits alongside the streaming adj tiles.
    resident_fp = streamed - 2 * tk * tn * x_itemsize + 2 * Kp * tn * x_itemsize
    x_resident = (Fp == tn) and (resident_fp <= budget)
    need = resident_fp if x_resident else streamed
    vmem_limit = min(cap - 4 * 1024 * 1024,
                     max(32 * 1024 * 1024, int(1.5 * need) + (2 << 20)))
    return _Plan(tm, tk, tn, Np, Kp, Fp, x_resident, int(vmem_limit))


def _spmm_kernel(adj_ref, x_ref, o_ref, *, tk, x_resident):
    """One (tm, tn) output tile; grid axis 2 is the K reduction.

    The output block index is independent of k, so o_ref stays resident in
    VMEM across the reduction and doubles as the float32 accumulator.
    """
    k = pl.program_id(2)

    @pl.when(k == 0)
    def _():
        o_ref[...] = jnp.zeros_like(o_ref)

    if x_resident:
        # x is a single VMEM-resident (Kp, tn) slab (DMA'd once); take the
        # k-th K-slice. Offsets are multiples of 128 (tk is 128-aligned).
        x_blk = x_ref[pl.ds(pl.multiple_of(k * tk, 128), tk), :]
    else:
        x_blk = x_ref[...]

    o_ref[...] += jnp.dot(
        adj_ref[...],
        x_blk.astype(adj_ref.dtype),  # bf16 MXU inputs when adj is bf16
        preferred_element_type=jnp.float32,
    )


def _pallas_spmm(adj_p, x_p, plan):
    """adj_p @ x_p for pre-padded operands; returns float32 (Np, Fp)."""
    Np, Kp = adj_p.shape
    Fp = x_p.shape[1]
    tm, tk, tn = plan.tm, plan.tk, plan.tn
    gm, gj, gk = Np // tm, Fp // tn, Kp // tk

    if plan.x_resident:
        # Constant-in-(i,k) block index -> the whole x slab is DMA'd once.
        x_spec = pl.BlockSpec((Kp, tn), lambda i, j, k: (0, j))
    else:
        x_spec = pl.BlockSpec((tk, tn), lambda i, j, k: (k, j))

    adj_isz = adj_p.dtype.itemsize
    x_isz = x_p.dtype.itemsize
    adj_bytes = gj * Np * Kp * adj_isz
    x_bytes = Kp * Fp * x_isz * (1 if plan.x_resident else gm)
    cost = pl.CostEstimate(
        flops=2 * Np * Kp * Fp,
        transcendentals=0,
        bytes_accessed=adj_bytes + x_bytes + Np * Fp * 4,
    )

    kernel = functools.partial(_spmm_kernel, tk=tk, x_resident=plan.x_resident)
    return pl.pallas_call(
        kernel,
        out_shape=jax.ShapeDtypeStruct((Np, Fp), jnp.float32),
        grid_spec=pl.GridSpec(
            grid=(gm, gj, gk),
            in_specs=[
                pl.BlockSpec((tm, tk), lambda i, j, k: (i, k)),  # adj tile
                x_spec,
            ],
            out_specs=pl.BlockSpec((tm, tn), lambda i, j, k: (i, j)),
        ),
        compiler_params=pltpu.CompilerParams(
            dimension_semantics=("parallel", "parallel", "arbitrary"),
            vmem_limit_bytes=plan.vmem_limit,
        ),
        cost_estimate=cost,
    )(adj_p, x_p)


@functools.partial(jax.jit, static_argnames=("order", "compute_dtype"))
def sg_convolution(x, adj, *, order=2, compute_dtype=jnp.bfloat16):
    """SGConvolution.forward: x <- adj @ x, applied `order` times.

    `compute_dtype` quantizes the adjacency (and MXU inputs); bfloat16 by
    default, which halves the dominant O(N^2) HBM stream. Intermediates and
    accumulation stay float32. compute_dtype=None keeps everything float32.
    """
    N, N2 = adj.shape
    assert N == N2, "adj must be square (N, N)"
    Nx, F = x.shape
    assert Nx == N, "x must be (N, F)"

    adj_dtype = jnp.dtype(compute_dtype) if compute_dtype is not None else adj.dtype
    plan = _plan_tiles(N, F, adj_dtype.itemsize, 4)

    # Cast + pad the adjacency exactly once (single fused expression); it is
    # reused for every hop, so no per-hop N^2-sized copies are materialized.
    adj_p = adj.astype(adj_dtype)
    if (plan.Np, plan.Kp) != (N, N):
        adj_p = jnp.pad(adj_p, ((0, plan.Np - N), (0, plan.Kp - N)))

    xp = x.astype(jnp.float32)
    if plan.Fp != F:
        xp = jnp.pad(xp, ((0, 0), (0, plan.Fp - F)))

    for _ in range(order):
        # The hop input needs Kp rows (output has Np rows). Padded rows only
        # ever multiply zero adjacency columns, so their contents are irrelevant.
        rows = xp.shape[0]
        if rows < plan.Kp:
            xp = jnp.pad(xp, ((0, plan.Kp - rows), (0, 0)))
        elif rows > plan.Kp:
            xp = xp[: plan.Kp]
        xp = _pallas_spmm(adj_p, xp, plan)

    # TODO(synk): if the same graph is reused across many calls, precompute the
    # propagated features (or adj^order) once instead of re-streaming adj.
    return xp[:N, :F].astype(x.dtype)


if __name__ == "__main__":
    # SGConvolution has no trainable parameters (order is a hyperparameter).
    order = 2
    N, F = 250, 96  # deliberately NOT tile multiples -> exercises the padding path

    key = jax.random.PRNGKey(0)
    k_adj, k_x = jax.random.split(key)

    # Synthetic row-normalized "adjacency" (dense stand-in for the sparse adj).
    adj_raw = jax.random.uniform(k_adj, (N, N), dtype=jnp.float32)
    adj = adj_raw / jnp.sum(adj_raw, axis=1, keepdims=True)
    x = jax.random.normal(k_x, (N, F), dtype=jnp.float32)

    # Exact float32 reference (the true SGConvolution output).
    ref_f32 = x
    for _ in range(order):
        ref_f32 = jnp.dot(adj, ref_f32, preferred_element_type=jnp.float32)

    # --- float32 path: must match the f32 reference tightly ---
    out_f32 = jax.block_until_ready(
        sg_convolution(x, adj, order=order, compute_dtype=None)
    )
    assert out_f32.shape == (N, F)
    assert jnp.allclose(out_f32, ref_f32, atol=1e-4, rtol=1e-4), "f32 mismatch vs reference"

    # --- bf16-adjacency path (default) ---
    out_bf16 = jax.block_until_ready(sg_convolution(x, adj, order=order))
    assert out_bf16.shape == (N, F)
    # Quantization-matched reference (bf16 adj / bf16 MXU inputs, f32 accumulate,
    # f32 intermediates) — validates the kernel itself.
    adj_q = adj.astype(jnp.bfloat16)
    ref_q = x
    for _ in range(order):
        ref_q = jnp.dot(adj_q, ref_q.astype(jnp.bfloat16),
                        preferred_element_type=jnp.float32)
    assert jnp.allclose(out_bf16, ref_q, atol=1e-3, rtol=1e-3), "bf16 mismatch vs matched ref"
    # Drift vs the true float32 SGConvolution output stays small.
    assert jnp.allclose(out_bf16, ref_f32, atol=1e-2, rtol=1e-2), "bf16 drift vs f32 too large"

    print("KERNEL_OK")
</pallas_src>

<mosaic_0001>
module attributes {stable_mosaic.version = 11 : i64} {
  func.func @_spmm_kernel(%arg0: i32, %arg1: i32, %arg2: i32, %arg3: memref<128x256xf32, #tpu.memory_space<vmem>>, %arg4: memref<256x128xf32, #tpu.memory_space<vmem>>, %arg5: memref<128x128xf32, #tpu.memory_space<vmem>>) attributes {dimension_semantics = [#tpu.dimension_semantics<parallel>, #tpu.dimension_semantics<parallel>, #tpu.dimension_semantics<arbitrary>], iteration_bounds = array<i64: 2, 1, 1>, scalar_prefetch = 0 : i64, scratch_operands = 0 : i64, tpu.core_type = #tpu.core_type<tc>, window_params = [{transform_indices = @transform_0, window_bounds = array<i64: 128, 256>}, {transform_indices = @transform_1, window_bounds = array<i64: 256, 128>}, {transform_indices = @transform_2, window_bounds = array<i64: 128, 128>}]} {
    %c0_i32 = arith.constant 0 : i32
    %0 = arith.cmpi eq, %arg2, %c0_i32 : i32
    %1 = arith.extui %0 : i1 to i32
    %c0_i32_0 = arith.constant 0 : i32
    %2 = arith.cmpi ne, %1, %c0_i32_0 : i32
    scf.if %2 {
      %cst_7 = arith.constant 0.000000e+00 : f32
      %12 = vector.broadcast %cst_7 : f32 to vector<128x128xf32>
      %c0_8 = arith.constant 0 : index
      %c0_9 = arith.constant 0 : index
      %13 = vector.load %arg5[%c0_8, %c0_9] : memref<128x128xf32, #tpu.memory_space<vmem>>, vector<128x128xf32>
      tpu.vector_store %arg5[%c0_8, %c0_9], %12 {strides = array<i32>} : memref<128x128xf32, #tpu.memory_space<vmem>>, vector<128x128xf32>,
    } else {
    }
    %c256_i32 = arith.constant 256 : i32
    %3 = arith.muli %arg2, %c256_i32 : i32
    %4 = tpu.assume_multiple %3, 128 : i32
    %5 = arith.index_cast %4 : i32 to index
    %c0 = arith.constant 0 : index
    %6 = vector.load %arg4[%5, %c0] : memref<256x128xf32, #tpu.memory_space<vmem>>, vector<256x128xf32>
    %c0_1 = arith.constant 0 : index
    %c0_2 = arith.constant 0 : index
    %7 = vector.load %arg5[%c0_1, %c0_2] : memref<128x128xf32, #tpu.memory_space<vmem>>, vector<128x128xf32>
    %c0_3 = arith.constant 0 : index
    %c0_4 = arith.constant 0 : index
    %8 = vector.load %arg3[%c0_3, %c0_4] : memref<128x256xf32, #tpu.memory_space<vmem>>, vector<128x256xf32>
    %cst = arith.constant dense<0.000000e+00> : vector<128x128xf32>
    %9 = tpu.matmul %8, %6, %cst {dimension_numbers = #tpu.dot_dimension_numbers<[1], [0], [0], [1], [0, 0, 1, 1], [], []>} : vector<128x256xf32>, vector<256x128xf32>, vector<128x128xf32> -> vector<128x128xf32>
    %10 = arith.addf %7, %9 : vector<128x128xf32>
    %c0_5 = arith.constant 0 : index
    %c0_6 = arith.constant 0 : index
    %11 = vector.load %arg5[%c0_5, %c0_6] : memref<128x128xf32, #tpu.memory_space<vmem>>, vector<128x128xf32>
    tpu.vector_store %arg5[%c0_5, %c0_6], %10 {strides = array<i32>} : memref<128x128xf32, #tpu.memory_space<vmem>>, vector<128x128xf32>,
    return
  }
  func.func @transform_0(%arg0: i32, %arg1: i32, %arg2: i32) -> (i32, i32) {
    %c0_i32 = arith.constant 0 : i32
    return %arg0, %arg2 : i32, i32
  }
  func.func @transform_1(%arg0: i32, %arg1: i32, %arg2: i32) -> (i32, i32) {
    %c0_i32 = arith.constant 0 : i32
    %c0_i32_0 = arith.constant 0 : i32
    return %c0_i32, %arg1 : i32, i32
  }
  func.func @transform_2(%arg0: i32, %arg1: i32, %arg2: i32) -> (i32, i32) {
    %c0_i32 = arith.constant 0 : i32
    return %arg0, %arg1 : i32, i32
  }
}

</mosaic_0001>

<llo_original>
// kernel: sg_convolution.2
$region0: #{sg_convolution.2}
  #allocation0 [shape = 'u32[]', space=smem, size = 0x4, offset = 0x4, fixed_abs, tag = 'smem constant byte address 0x4 - core index']
  #allocation1 [shape = 'u32[144,128]{1,0:T(1,128)}', space=vmem, size = 0x12000, scoped, tag = 'internal scratch']
  %s0 = inlined_call_operand.vmem [shape: f32[256,256], index: 0, kind: input, shape index: {}]
  %s1 = inlined_call_operand.vmem [shape: f32[256,128], index: 1, kind: input, shape index: {}]
  %s2 = inlined_call_operand.vmem [shape: f32[256,128], index: 2, kind: output, shape index: {}]
  %s3 = sld [smem:[#allocation0]]
  $region45: #{sg_convolution.2} parent=0
    _
  %s5 = ssub.s32 1, %s3
  %s6 = scalar_select 0, %s5, %s3
  loop: start=0, step=1, limit=4
  $region2: #{sg_convolution.2} parent=0 // loop_pre_header
    _
  $region3: #{sg_convolution.2} parent=0 // loop_header
    %s8 = sphi 0, %s12
    %p9 = scmp.ge.s32.totalorder %s8, 4
    %s15 = sphi 0, %s34
    %s16 = sphi 0, %s30
    %s17 = sphi 0, %s26
    %s18 = sphi 0, %s15
    %s19 = sphi 0, %s16
    %s20 = sphi 0, %s17
    %s21 = sphi 0, %s18
    %s22 = sphi 0, %s19
    %s23 = sphi 0, %s20
    %s39 = sphi 0, %s41
    %s42 = sphi 0, %s39
    %s43 = sphi 0, %s42
    %s59 = sphi 0, %s43
    %s65 = sphi 0, %s67
    %s68 = sphi 0, %s65
    %s69 = sphi 0, %s68
    %s85 = sphi 0, %s69
    %s93 = sphi 0, %s95
    %s96 = sphi 0, %s93
    %s97 = sphi 0, %s96
    %s113 = sphi 0, %s97
  $region4: #{sg_convolution.2} parent=0 // loop_header_branch
    %11 = sbr.rel (%p9) target = $region8
  $region5: #{sg_convolution.2} parent=0 // loop_body
    %s13 = ssub.s32 %s8, 1
    %s14 = ssub.s32 %s8, 2
    %s24 = sadd.s32 1, %s17
    %p25 = scmp.ge.s32.totalorder %s24, 1
    %s26 = scalar_select %p25, 0, %s24
    %s27 = sadd.s32 1, %s16
    %s28 = scalar_select %p25, %s27, %s16
    %p29 = scmp.ge.s32.totalorder %s28, 1
    %s30 = scalar_select %p29, 0, %s28
    %s31 = sadd.s32 1, %s15
    %s32 = scalar_select %p29, %s31, %s15
    %p33 = scmp.ge.s32.totalorder %s32, 2
    %s34 = scalar_select %p33, 0, %s32
    %s35 = ssub.s32 %s15, %s34
    %s36 = ssub.s32 %s17, %s26
    %s37 = sor.u32 %s35, %s36
    %p38 = scmp.eq.s32.totalorder %s37, 0
    %s40 = sadd.s32 %s39, 1
    %s41 = scalar_select %p38, %s39, %s40
    %p44 = pneg %p38
    %p45 = scmp.eq.s32.totalorder %s8, 1
    %p46 = por %p44, %p45
    %p47 = scmp.ne.s32.totalorder %s39, %s42
    %p48 = scmp.eq.s32.totalorder %s8, 0
    %p49 = por %p47, %p48
    %p50 = scmp.ne.s32.totalorder %s39, %s42
    %p51 = scmp.eq.s32.totalorder %s13, 1
    %p52 = por %p50, %p51
    %p53 = scmp.ne.s32.totalorder %s42, %s43
    %p54 = scmp.eq.s32.totalorder %s13, 0
    %p55 = por %p53, %p54
    %p56 = scmp.ne.s32.totalorder %s42, %s43
    %p57 = scmp.eq.s32.totalorder %s14, 1
    %p58 = por %p56, %p57
    %p60 = scmp.ne.s32.totalorder %s43, %s59
    %p61 = scmp.eq.s32.totalorder %s14, 0
    %p62 = por %p60, %p61
    %s63 = ssub.s32 %s16, %s30
    %p64 = scmp.eq.s32.totalorder %s63, 0
    %s66 = sadd.s32 %s65, 1
    %s67 = scalar_select %p64, %s65, %s66
    %p70 = pneg %p64
    %p71 = scmp.eq.s32.totalorder %s8, 1
    %p72 = por %p70, %p71
    %p73 = scmp.ne.s32.totalorder %s65, %s68
    %p74 = scmp.eq.s32.totalorder %s8, 0
    %p75 = por %p73, %p74
    %p76 = scmp.ne.s32.totalorder %s65, %s68
    %p77 = scmp.eq.s32.totalorder %s13, 1
    %p78 = por %p76, %p77
    %p79 = scmp.ne.s32.totalorder %s68, %s69
    %p80 = scmp.eq.s32.totalorder %s13, 0
    %p81 = por %p79, %p80
    %p82 = scmp.ne.s32.totalorder %s68, %s69
    %p83 = scmp.eq.s32.totalorder %s14, 1
    %p84 = por %p82, %p83
    %p86 = scmp.ne.s32.totalorder %s69, %s85
    %p87 = scmp.eq.s32.totalorder %s14, 0
    %p88 = por %p86, %p87
    %s89 = ssub.s32 %s15, %s34
    %s90 = ssub.s32 %s16, %s30
    %s91 = sor.u32 %s89, %s90
    %p92 = scmp.eq.s32.totalorder %s91, 0
    %s94 = sadd.s32 %s93, 1
    %s95 = scalar_select %p92, %s93, %s94
    %p98 = pneg %p92
    %p99 = scmp.eq.s32.totalorder %s8, 1
    %p100 = por %p98, %p99
    %p101 = scmp.ne.s32.totalorder %s93, %s96
    %p102 = scmp.eq.s32.totalorder %s8, 0
    %p103 = por %p101, %p102
    %p104 = scmp.ne.s32.totalorder %s93, %s96
    %p105 = scmp.eq.s32.totalorder %s13, 1
    %p106 = por %p104, %p105
    %p107 = scmp.ne.s32.totalorder %s96, %s97
    %p108 = scmp.eq.s32.totalorder %s13, 0
    %p109 = por %p107, %p108
    %p110 = scmp.ne.s32.totalorder %s96, %s97
    %p111 = scmp.eq.s32.totalorder %s14, 1
    %p112 = por %p110, %p111
    %p114 = scmp.ne.s32.totalorder %s97, %s113
    %p115 = scmp.eq.s32.totalorder %s14, 0
    %p116 = por %p114, %p115
    %p117 = scmp.le.s32.totalorder 1, %s8
    %p118 = scmp.lt.s32.totalorder %s8, 3
    %p119 = pnand %p117, %p118
    %p120 = pneg %p119
    // Predicated region
    $region9: #{sg_convolution.2} parent=5 // pred_check
      _
    $region10: #{sg_convolution.2} parent=5 // pred_check_branch
      %122 = sbr.rel (%p119) target = $region12
    $region11: #{sg_convolution.2} parent=5 // pred_region
      %s123 = ssub.s32 %s8, 1
      // Predicated region
      $region13: #{sg_convolution.2} parent=11 // pred_check
        %p124 = pneg %p81
      $region14: #{sg_convolution.2} parent=11 // pred_check_branch
        %126 = sbr.rel (%p124) target = $region16
      $region15: #{sg_convolution.2} parent=11 // pred_region
        %p127 = scmp.lt.s32.totalorder %s19, 0
        %s128 = scalar_select %p127, %s19, 0
        %s129 = smul.addr %s128, 8
        %s130 = scalar_lea.vmem %s1, %s129
      $region16: #{sg_convolution.2} parent=11 // pred_fallthru
        _
    $region12: #{sg_convolution.2} parent=5 // pred_fallthru
      _
    %p131 = scmp.lt.s32.totalorder %s8, 2
    // Predicated region
    $region17: #{sg_convolution.2} parent=5 // pred_check
      %p132 = pneg %p131
    $region18: #{sg_convolution.2} parent=5 // pred_check_branch
      %134 = sbr.rel (%p132) target = $region20
    $region19: #{sg_convolution.2} parent=5 // pred_region
      // Predicated region
      $region21: #{sg_convolution.2} parent=19 // pred_check
        %p135 = pneg %p49
      $region22: #{sg_convolution.2} parent=19 // pred_check_branch
        %137 = sbr.rel (%p135) target = $region24
      $region23: #{sg_convolution.2} parent=19 // pred_region
        %s138 = smul.u32 16, %s15
        %s139 = smul.u32 2, %s17
        %p140 = scmp.lt.s32.totalorder %s138, 31
        %s141 = scalar_select %p140, %s138, 31
        %p142 = scmp.lt.s32.totalorder %s139, 1
        %s143 = scalar_select %p142, %s139, 1
        %s144 = smul.addr %s141, 2
        %s145 = sadd.s32 %s143, %s144
        %s146 = smul.addr %s145, 8
        %s147 = scalar_lea.vmem %s0, %s146
        %s148 = smul.u32 16, %s15
        %s149 = smul.u32 2, %s17
      $region24: #{sg_convolution.2} parent=19 // pred_fallthru
        _
    $region20: #{sg_convolution.2} parent=5 // pred_fallthru
      _
    %p150 = scmp.le.s32.totalorder 1, %s8
    %p151 = scmp.lt.s32.totalorder %s8, 3
    %p152 = pnand %p150, %p151
    %p153 = pneg %p152
    // Predicated region
    $region25: #{sg_convolution.2} parent=5 // pred_check
      _
    $region26: #{sg_convolution.2} parent=5 // pred_check_branch
      %155 = sbr.rel (%p152) target = $region28
    $region27: #{sg_convolution.2} parent=5 // pred_region
      %s156 = ssub.s32 %s8, 1
      %s157 = smul.u32 16, %s18
      %s158 = smul.u32 2, %s20
      %p159 = scmp.lt.s32.totalorder %s157, 31
      %s160 = scalar_select %p159, %s157, 31
      %p161 = scmp.lt.s32.totalorder %s158, 1
      %s162 = scalar_select %p161, %s158, 1
      %s163 = smul.addr %s160, 2
      %s164 = sadd.s32 %s162, %s163
      %s165 = smul.addr %s164, 8
      %s166 = scalar_lea.vmem %s0, %s165
      %p167 = pneg %p55
      %p168 = pneg %p52
      %p169 = scmp.lt.s32.totalorder %s19, 0
      %s170 = scalar_select %p169, %s19, 0
      %s171 = smul.addr %s170, 8
      %s172 = scalar_lea.vmem %s1, %s171
      %p173 = pneg %p81
      %p174 = pneg %p78
      %p175 = pneg %p109
      %p176 = pneg %p106
      %s177 = smul.u32 16, %s18
      %p178 = scmp.lt.s32.totalorder %s177, 31
      %s179 = scalar_select %p178, %s177, 31
      %p180 = scmp.lt.s32.totalorder %s19, 0
      %s181 = scalar_select %p180, %s19, 0
      %s182 = sadd.s32 %s181, %s179
      %s183 = smul.addr %s182, 8
      %s184 = scalar_lea.vmem %s2, %s183
      %s185 = smul.u32 16, %s18
      %s186 = smul.u32 2, %s20
      %p187 = scmp.lt.s32.totalorder %s185, 31
      %s188 = scalar_select %p187, %s185, 31
      %p189 = scmp.lt.s32.totalorder %s186, 1
      %s190 = scalar_select %p189, %s186, 1
      %s191 = smul.addr %s188, 2
      %s192 = sadd.s32 %s190, %s191
      %s193 = smul.addr %s192, 8
      %s194 = scalar_lea.vmem %s0, %s193
      %s195 = smul.u32 16, %s18
      %s196 = smul.u32 2, %s20
      %p197 = scmp.lt.s32.totalorder %s19, 0
      %s198 = scalar_select %p197, %s19, 0
      %s199 = smul.addr %s198, 8
      %s200 = scalar_lea.vmem %s1, %s199
      %s201 = smul.u32 16, %s18
      %p202 = scmp.lt.s32.totalorder %s201, 31
      %s203 = scalar_select %p202, %s201, 31
      %p204 = scmp.lt.s32.totalorder %s19, 0
      %s205 = scalar_select %p204, %s19, 0
      %s206 = sadd.s32 %s205, %s203
      %s207 = smul.addr %s206, 8
      %s208 = scalar_lea.vmem %s2, %s207
      %s209 = smul.u32 16, %s18
      %p210 = scmp.eq.s32.totalorder %s20, 0
      // Predicated region
      $region29: #{sg_convolution.2} parent=27 // pred_check
        %p211 = pneg %p210
      $region30: #{sg_convolution.2} parent=27 // pred_check_branch
        %213 = sbr.rel (%p211) target = $region32
      $region31: #{sg_convolution.2} parent=27 // pred_region
        %214 = vst [vmem:[%s208] sm:$0xff] 0.0
        %215 = vst [vmem:[%s208 + $0x8] sm:$0xff] 0.0
        %216 = vst [vmem:[%s208 + $0x10] sm:$0xff] 0.0
        %217 = vst [vmem:[%s208 + $0x18] sm:$0xff] 0.0
        %218 = vst [vmem:[%s208 + $0x20] sm:$0xff] 0.0
        %219 = vst [vmem:[%s208 + $0x28] sm:$0xff] 0.0
        %220 = vst [vmem:[%s208 + $0x30] sm:$0xff] 0.0
        %221 = vst [vmem:[%s208 + $0x38] sm:$0xff] 0.0
        %222 = vst [vmem:[%s208 + $0x40] sm:$0xff] 0.0
        %223 = vst [vmem:[%s208 + $0x48] sm:$0xff] 0.0
        %224 = vst [vmem:[%s208 + $0x50] sm:$0xff] 0.0
        %225 = vst [vmem:[%s208 + $0x58] sm:$0xff] 0.0
        %226 = vst [vmem:[%s208 + $0x60] sm:$0xff] 0.0
        %227 = vst [vmem:[%s208 + $0x68] sm:$0xff] 0.0
        %228 = vst [vmem:[%s208 + $0x70] sm:$0xff] 0.0
        %229 = vst [vmem:[%s208 + $0x78] sm:$0xff] 0.0
      $region32: #{sg_convolution.2} parent=27 // pred_fallthru
        _
      %s230 = smul.u32 %s20, 256
      %s231 = scalar_lea.vmem %s200, %s230
      %v232 = vld [vmem:[%s231] sm:$0xff]
      %v233 = vld [vmem:[%s231 + $0x8] sm:$0xff]
      %v234 = vld [vmem:[%s231 + $0x10] sm:$0xff]
      %v235 = vld [vmem:[%s231 + $0x18] sm:$0xff]
      %v236 = vld [vmem:[%s231 + $0x20] sm:$0xff]
      %v237 = vld [vmem:[%s231 + $0x28] sm:$0xff]
      %v238 = vld [vmem:[%s231 + $0x30] sm:$0xff]
      %v239 = vld [vmem:[%s231 + $0x38] sm:$0xff]
      %v240 = vld [vmem:[%s231 + $0x40] sm:$0xff]
      %v241 = vld [vmem:[%s231 + $0x48] sm:$0xff]
      %v242 = vld [vmem:[%s231 + $0x50] sm:$0xff]
      %v243 = vld [vmem:[%s231 + $0x58] sm:$0xff]
      %v244 = vld [vmem:[%s231 + $0x60] sm:$0xff]
      %v245 = vld [vmem:[%s231 + $0x68] sm:$0xff]
      %v246 = vld [vmem:[%s231 + $0x70] sm:$0xff]
      %v247 = vld [vmem:[%s231 + $0x78] sm:$0xff]
      %v248 = vld [vmem:[%s231 + $0x80] sm:$0xff]
      %v249 = vld [vmem:[%s231 + $0x88] sm:$0xff]
      %v250 = vld [vmem:[%s231 + $0x90] sm:$0xff]
      %v251 = vld [vmem:[%s231 + $0x98] sm:$0xff]
      %v252 = vld [vmem:[%s231 + $0xa0] sm:$0xff]
      %v253 = vld [vmem:[%s231 + $0xa8] sm:$0xff]
      %v254 = vld [vmem:[%s231 + $0xb0] sm:$0xff]
      %v255 = vld [vmem:[%s231 + $0xb8] sm:$0xff]
      %v256 = vld [vmem:[%s231 + $0xc0] sm:$0xff]
      %v257 = vld [vmem:[%s231 + $0xc8] sm:$0xff]
      %v258 = vld [vmem:[%s231 + $0xd0] sm:$0xff]
      %v259 = vld [vmem:[%s231 + $0xd8] sm:$0xff]
      %v260 = vld [vmem:[%s231 + $0xe0] sm:$0xff]
      %v261 = vld [vmem:[%s231 + $0xe8] sm:$0xff]
      %v262 = vld [vmem:[%s231 + $0xf0] sm:$0xff]
      %v263 = vld [vmem:[%s231 + $0xf8] sm:$0xff]
      %v264 = vld [vmem:[%s208] sm:$0xff]
      %v265 = vld [vmem:[%s208 + $0x8] sm:$0xff]
      %v266 = vld [vmem:[%s208 + $0x10] sm:$0xff]
      %v267 = vld [vmem:[%s208 + $0x18] sm:$0xff]
      %v268 = vld [vmem:[%s208 + $0x20] sm:$0xff]
      %v269 = vld [vmem:[%s208 + $0x28] sm:$0xff]
      %v270 = vld [vmem:[%s208 + $0x30] sm:$0xff]
      %v271 = vld [vmem:[%s208 + $0x38] sm:$0xff]
      %v272 = vld [vmem:[%s208 + $0x40] sm:$0xff]
      %v273 = vld [vmem:[%s208 + $0x48] sm:$0xff]
      %v274 = vld [vmem:[%s208 + $0x50] sm:$0xff]
      %v275 = vld [vmem:[%s208 + $0x58] sm:$0xff]
      %v276 = vld [vmem:[%s208 + $0x60] sm:$0xff]
      %v277 = vld [vmem:[%s208 + $0x68] sm:$0xff]
      %v278 = vld [vmem:[%s208 + $0x70] sm:$0xff]
      %v279 = vld [vmem:[%s208 + $0x78] sm:$0xff]
      %v280 = vld [vmem:[%s194] sm:$0xff]
      %v281 = vld [vmem:[%s194 + $0x8] sm:$0xff]
      %v282 = vld [vmem:[%s194 + $0x10] sm:$0xff]
      %v283 = vld [vmem:[%s194 + $0x18] sm:$0xff]
      %v284 = vld [vmem:[%s194 + $0x20] sm:$0xff]
      %v285 = vld [vmem:[%s194 + $0x28] sm:$0xff]
      %v286 = vld [vmem:[%s194 + $0x30] sm:$0xff]
      %v287 = vld [vmem:[%s194 + $0x38] sm:$0xff]
      %v288 = vld [vmem:[%s194 + $0x40] sm:$0xff]
      %v289 = vld [vmem:[%s194 + $0x48] sm:$0xff]
      %v290 = vld [vmem:[%s194 + $0x50] sm:$0xff]
      %v291 = vld [vmem:[%s194 + $0x58] sm:$0xff]
      %v292 = vld [vmem:[%s194 + $0x60] sm:$0xff]
      %v293 = vld [vmem:[%s194 + $0x68] sm:$0xff]
      %v294 = vld [vmem:[%s194 + $0x70] sm:$0xff]
      %v295 = vld [vmem:[%s194 + $0x78] sm:$0xff]
      %v296 = vld [vmem:[%s194 + $0x80] sm:$0xff]
      %v297 = vld [vmem:[%s194 + $0x88] sm:$0xff]
      %v298 = vld [vmem:[%s194 + $0x90] sm:$0xff]
      %v299 = vld [vmem:[%s194 + $0x98] sm:$0xff]
      %v300 = vld [vmem:[%s194 + $0xa0] sm:$0xff]
      %v301 = vld [vmem:[%s194 + $0xa8] sm:$0xff]
      %v302 = vld [vmem:[%s194 + $0xb0] sm:$0xff]
      %v303 = vld [vmem:[%s194 + $0xb8] sm:$0xff]
      %v304 = vld [vmem:[%s194 + $0xc0] sm:$0xff]
      %v305 = vld [vmem:[%s194 + $0xc8] sm:$0xff]
      %v306 = vld [vmem:[%s194 + $0xd0] sm:$0xff]
      %v307 = vld [vmem:[%s194 + $0xd8] sm:$0xff]
      %v308 = vld [vmem:[%s194 + $0xe0] sm:$0xff]
      %v309 = vld [vmem:[%s194 + $0xe8] sm:$0xff]
      %v310 = vld [vmem:[%s194 + $0xf0] sm:$0xff]
      %v311 = vld [vmem:[%s194 + $0xf8] sm:$0xff]
      %312 = vmatprep.subr.mxu0 0.0
      %313 = vmatpush1.msra.mxu0 %v232
      %314 = vmatprep.subr.mxu0 0.0
      %315 = vmatpush1.msra.mxu0 %v233
      %316 = vmatprep.subr.mxu0 0.0
      %317 = vmatpush1.msra.mxu0 %v234
      %318 = vmatprep.subr.mxu0 0.0
      %319 = vmatpush1.msra.mxu0 %v235
      %320 = vmatprep.subr.mxu0 0.0
      %321 = vmatpush1.msra.mxu0 %v236
      %322 = vmatprep.subr.mxu0 0.0
      %323 = vmatpush1.msra.mxu0 %v237
      %324 = vmatprep.subr.mxu0 0.0
      %325 = vmatpush1.msra.mxu0 %v238
      %326 = vmatprep.subr.mxu0 0.0
      %327 = vmatpush1.msra.mxu0 %v239
      %328 = vmatprep.subr.mxu0 0.0
      %329 = vmatpush1.msra.mxu0 %v240
      %330 = vmatprep.subr.mxu0 0.0
      %331 = vmatpush1.msra.mxu0 %v241
      %332 = vmatprep.subr.mxu0 0.0
      %333 = vmatpush1.msra.mxu0 %v242
      %334 = vmatprep.subr.mxu0 0.0
      %335 = vmatpush1.msra.mxu0 %v243
      %336 = vmatprep.subr.mxu0 0.0
      %337 = vmatpush1.msra.mxu0 %v244
      %338 = vmatprep.subr.mxu0 0.0
      %339 = vmatpush1.msra.mxu0 %v245
      %340 = vmatprep.subr.mxu0 0.0
      %341 = vmatpush1.msra.mxu0 %v246
      %342 = vmatprep.subr.mxu0 0.0
      %343 = vmatpush1.msra.mxu0 %v247
      %344 = vmatprep.subr.mxu0 0.0
      %345 = vmatpush1.msra.mxu0 %v248
      %346 = vmatprep.subr.mxu0 0.0
      %347 = vmatpush1.msra.mxu0 %v249
      %348 = vmatprep.subr.mxu0 0.0
      %349 = vmatpush1.msra.mxu0 %v250
      %350 = vmatprep.subr.mxu0 0.0
      %351 = vmatpush1.msra.mxu0 %v251
      %352 = vmatprep.subr.mxu0 0.0
      %353 = vmatpush1.msra.mxu0 %v252
      %354 = vmatprep.subr.mxu0 0.0
      %355 = vmatpush1.msra.mxu0 %v253
      %356 = vmatprep.subr.mxu0 0.0
      %357 = vmatpush1.msra.mxu0 %v254
      %358 = vmatprep.subr.mxu0 0.0
      %359 = vmatpush1.msra.mxu0 %v255
      %360 = vmatprep.subr.mxu0 0.0
      %361 = vmatpush1.msra.mxu0 %v256
      %362 = vmatprep.subr.mxu0 0.0
      %363 = vmatpush1.msra.mxu0 %v257
      %364 = vmatprep.subr.mxu0 0.0
      %365 = vmatpush1.msra.mxu0 %v258
      %366 = vmatprep.subr.mxu0 0.0
      %367 = vmatpush1.msra.mxu0 %v259
      %368 = vmatprep.subr.mxu0 0.0
      %369 = vmatpush1.msra.mxu0 %v260
      %370 = vmatprep.subr.mxu0 0.0
      %371 = vmatpush1.msra.mxu0 %v261
      %372 = vmatprep.subr.mxu0 0.0
      %373 = vmatpush1.msra.mxu0 %v262
      %374 = vmatprep.subr.mxu0 0.0
      %375 = vmatpush1.msra.mxu0 %v263
      %376 = vmatprep.mubr.f32.mxu0 %v281
      %377 = vmatmul.mubr.f32.gmra.mrb[0].mxu0 %v280
      %v378 = vpop.f32.mrb[0].mxu0
      %v379 = vadd.f32 0.0, %v378
      %v380 = vpop.f32.mrb[0].mxu0
      %381 = vmatprep.mubr.f32.mxu0 %v283
      %382 = vmatmul.mubr.f32.gmra.mrb[0].mxu0 %v282
      %v383 = vpop.f32.mrb[0].mxu0
      %v384 = vadd.f32 0.0, %v383
      %v385 = vpop.f32.mrb[0].mxu0
      %386 = vmatprep.mubr.f32.mxu0 %v285
      %387 = vmatmul.mubr.f32.gmra.mrb[0].mxu0 %v284
      %v388 = vpop.f32.mrb[0].mxu0
      %v389 = vadd.f32 0.0, %v388
      %v390 = vpop.f32.mrb[0].mxu0
      %391 = vmatprep.mubr.f32.mxu0 %v287
      %392 = vmatmul.mubr.f32.gmra.mrb[0].mxu0 %v286
      %v393 = vpop.f32.mrb[0].mxu0
      %v394 = vadd.f32 0.0, %v393
      %v395 = vpop.f32.mrb[0].mxu0
      %396 = vmatprep.mubr.f32.mxu0 %v289
      %397 = vmatmul.mubr.f32.gmra.mrb[0].mxu0 %v288
      %v398 = vpop.f32.mrb[0].mxu0
      %v399 = vadd.f32 0.0, %v398
      %v400 = vpop.f32.mrb[0].mxu0
      %401 = vmatprep.mubr.f32.mxu0 %v291
      %402 = vmatmul.mubr.f32.gmra.mrb[0].mxu0 %v290
      %v403 = vpop.f32.mrb[0].mxu0
      %v404 = vadd.f32 0.0, %v403
      %v405 = vpop.f32.mrb[0].mxu0
      %406 = vmatprep.mubr.f32.mxu0 %v293
      %407 = vmatmul.mubr.f32.gmra.mrb[0].mxu0 %v292
      %v408 = vpop.f32.mrb[0].mxu0
      %v409 = vadd.f32 0.0, %v408
      %v410 = vpop.f32.mrb[0].mxu0
      %411 = vmatprep.mubr.f32.mxu0 %v295
      %412 = vmatmul.mubr.f32.gmra.mrb[0].mxu0 %v294
      %v413 = vpop.f32.mrb[0].mxu0
      %v414 = vadd.f32 0.0, %v413
      %v415 = vpop.f32.mrb[0].mxu0
      %416 = vmatprep.mubr.f32.mxu0 %v297
      %417 = vmatmul.mubr.f32.gmra.mrb[0].mxu0 %v296
      %v418 = vpop.f32.mrb[0].mxu0
      %v419 = vadd.f32 0.0, %v418
      %v420 = vpop.f32.mrb[0].mxu0
      %421 = vmatprep.mubr.f32.mxu0 %v299
      %422 = vmatmul.mubr.f32.gmra.mrb[0].mxu0 %v298
      %v423 = vpop.f32.mrb[0].mxu0
      %v424 = vadd.f32 0.0, %v423
      %v425 = vpop.f32.mrb[0].mxu0
      %426 = vmatprep.mubr.f32.mxu0 %v301
      %427 = vmatmul.mubr.f32.gmra.mrb[0].mxu0 %v300
      %v428 = vpop.f32.mrb[0].mxu0
      %v429 = vadd.f32 0.0, %v428
      %v430 = vpop.f32.mrb[0].mxu0
      %431 = vmatprep.mubr.f32.mxu0 %v303
      %432 = vmatmul.mubr.f32.gmra.mrb[0].mxu0 %v302
      %v433 = vpop.f32.mrb[0].mxu0
      %v434 = vadd.f32 0.0, %v433
      %v435 = vpop.f32.mrb[0].mxu0
      %436 = vmatprep.mubr.f32.mxu0 %v305
      %437 = vmatmul.mubr.f32.gmra.mrb[0].mxu0 %v304
      %v438 = vpop.f32.mrb[0].mxu0
      %v439 = vadd.f32 0.0, %v438
      %v440 = vpop.f32.mrb[0].mxu0
      %441 = vmatprep.mubr.f32.mxu0 %v307
      %442 = vmatmul.mubr.f32.gmra.mrb[0].mxu0 %v306
      %v443 = vpop.f32.mrb[0].mxu0
      %v444 = vadd.f32 0.0, %v443
      %v445 = vpop.f32.mrb[0].mxu0
      %446 = vmatprep.mubr.f32.mxu0 %v309
      %447 = vmatmul.mubr.f32.gmra.mrb[0].mxu0 %v308
      %v448 = vpop.f32.mrb[0].mxu0
      %v449 = vadd.f32 0.0, %v448
      %v450 = vpop.f32.mrb[0].mxu0
      %451 = vmatprep.mubr.f32.mxu0 %v311
      %452 = vmatmul.mubr.f32.gmra.mrb[0].mxu0 %v310
      %v453 = vpop.f32.mrb[0].mxu0
      %v454 = vadd.f32 0.0, %v453
      %v455 = vpop.f32.mrb[0].mxu0
      %456 = vdwg.mxu0
      %v457 = vadd.f32 %v264, %v379
      %v458 = vadd.f32 %v265, %v384
      %v459 = vadd.f32 %v266, %v389
      %v460 = vadd.f32 %v267, %v394
      %v461 = vadd.f32 %v268, %v399
      %v462 = vadd.f32 %v269, %v404
      %v463 = vadd.f32 %v270, %v409
      %v464 = vadd.f32 %v271, %v414
      %v465 = vadd.f32 %v272, %v419
      %v466 = vadd.f32 %v273, %v424
      %v467 = vadd.f32 %v274, %v429
      %v468 = vadd.f32 %v275, %v434
      %v469 = vadd.f32 %v276, %v439
      %v470 = vadd.f32 %v277, %v444
      %v471 = vadd.f32 %v278, %v449
      %v472 = vadd.f32 %v279, %v454
      %473 = vst [vmem:[%s208] sm:$0xff] %v457
      %474 = vst [vmem:[%s208 + $0x8] sm:$0xff] %v458
      %475 = vst [vmem:[%s208 + $0x10] sm:$0xff] %v459
      %476 = vst [vmem:[%s208 + $0x18] sm:$0xff] %v460
      %477 = vst [vmem:[%s208 + $0x20] sm:$0xff] %v461
      %478 = vst [vmem:[%s208 + $0x28] sm:$0xff] %v462
      %479 = vst [vmem:[%s208 + $0x30] sm:$0xff] %v463
      %480 = vst [vmem:[%s208 + $0x38] sm:$0xff] %v464
      %481 = vst [vmem:[%s208 + $0x40] sm:$0xff] %v465
      %482 = vst [vmem:[%s208 + $0x48] sm:$0xff] %v466
      %483 = vst [vmem:[%s208 + $0x50] sm:$0xff] %v467
      %484 = vst [vmem:[%s208 + $0x58] sm:$0xff] %v468
      %485 = vst [vmem:[%s208 + $0x60] sm:$0xff] %v469
      %486 = vst [vmem:[%s208 + $0x68] sm:$0xff] %v470
      %487 = vst [vmem:[%s208 + $0x70] sm:$0xff] %v471
      %488 = vst [vmem:[%s208 + $0x78] sm:$0xff] %v472
      %s489 = smul.u32 16, %s18
      %p490 = scmp.lt.s32.totalorder %s489, 31
      %s491 = scalar_select %p490, %s489, 31
      %p492 = scmp.lt.s32.totalorder %s19, 0
      %s493 = scalar_select %p492, %s19, 0
      %s494 = sadd.s32 %s493, %s491
      %s495 = smul.addr %s494, 8
      %s496 = scalar_lea.vmem %s2, %s495
      // Predicated region
      $region33: #{sg_convolution.2} parent=27 // pred_check
        %p497 = pneg %p106
      $region34: #{sg_convolution.2} parent=27 // pred_check_branch
        %499 = sbr.rel (%p497) target = $region36
      $region35: #{sg_convolution.2} parent=27 // pred_region
        %s500 = smul.u32 16, %s18
      $region36: #{sg_convolution.2} parent=27 // pred_fallthru
        _
    $region28: #{sg_convolution.2} parent=5 // pred_fallthru
      _
    %p501 = scmp.le.s32.totalorder 2, %s8
    // Predicated region
    $region37: #{sg_convolution.2} parent=5 // pred_check
      %p502 = pneg %p501
    $region38: #{sg_convolution.2} parent=5 // pred_check_branch
      %504 = sbr.rel (%p502) target = $region40
    $region39: #{sg_convolution.2} parent=5 // pred_region
      %s505 = ssub.s32 %s8, 2
      // Predicated region
      $region41: #{sg_convolution.2} parent=39 // pred_check
        %p506 = pneg %p112
      $region42: #{sg_convolution.2} parent=39 // pred_check_branch
        %508 = sbr.rel (%p506) target = $region44
      $region43: #{sg_convolution.2} parent=39 // pred_region
        %s509 = smul.u32 16, %s21
        %p510 = scmp.lt.s32.totalorder %s509, 31
        %s511 = scalar_select %p510, %s509, 31
        %p512 = scmp.lt.s32.totalorder %s22, 0
        %s513 = scalar_select %p512, %s22, 0
        %s514 = sadd.s32 %s513, %s511
        %s515 = smul.addr %s514, 8
        %s516 = scalar_lea.vmem %s2, %s515
      $region44: #{sg_convolution.2} parent=39 // pred_fallthru
        _
    $region40: #{sg_convolution.2} parent=5 // pred_fallthru
      _
  $region6: #{sg_convolution.2} parent=0 // loop_footer
    %s12 = sadd.s32 1, %s8
  $region7: #{sg_convolution.2} parent=0 // loop_footer_branch
    %7 = sbr.rel target = $region3
  $region8: #{sg_convolution.2} parent=0 // loop_exit
    _

</llo_original>
